<compile_context>
chip_gen: v5e
topology: v5e:2x2
jax: 0.10.0
libtpu: 0.0.40
codegen_flags: <defaults>
</compile_context>

<pallas_src>
import functools

import jax
import jax.numpy as jnp
from jax.experimental import pallas as pl
from jax.experimental.pallas import tpu as pltpu


# ---------------------------------------------------------------------------
# Kernel 1: RMSNorm (gain folded into weight) + fused QKV projection.
# Channel-major in, Q/V channel-major out, K pre-transposed to row-major.
# ---------------------------------------------------------------------------
def _norm_qkv_kernel(x_ref, w_ref, q_ref, k_ref, v_ref, *, hidden, eps):
    # x_ref : (1, C, TN)        input dtype (channel-major slab of NCHW)
    # w_ref : (3*hidden, C)     bf16  == W_qkv * (sqrt(C) * g)[None, :]
    # q_ref : (1, hidden, TN)   bf16  channel-major Q
    # k_ref : (1, TN, hidden)   bf16  row-major K (pre-transposed for QK^T)
    # v_ref : (1, hidden, TN)   bf16  channel-major V
    x = x_ref[0].astype(jnp.float32)                       # (C, TN)
    ssum = jnp.sum(x * x, axis=0, keepdims=True)           # (1, TN)  sublane reduce
    # F.normalize semantics: x / max(||x||, eps)  (eps folded as eps^2 under rsqrt)
    inv = jax.lax.rsqrt(jnp.maximum(ssum, eps * eps))      # EUP
    xn = (x * inv).astype(jnp.bfloat16)                    # unit columns -> bf16 MXU input

    # One wide projection for all heads and all of q/k/v: (3H, C) @ (C, TN).
    qkv = jnp.dot(w_ref[...], xn, preferred_element_type=jnp.float32)   # (3H, TN) f32
    q_ref[0] = qkv[:hidden, :].astype(jnp.bfloat16)
    v_ref[0] = qkv[2 * hidden:, :].astype(jnp.bfloat16)
    # One XLU transpose per N-tile (amortized; replaces per-head per-q-tile
    # transposes inside the attention kernel).
    k_ref[0] = qkv[hidden:2 * hidden, :].T.astype(jnp.bfloat16)


# ---------------------------------------------------------------------------
# Kernel 2: per-q-tile attention over all heads + fused output 1x1 conv.
# Transposed (channel-major) formulation -> lane-dense (C, TQ) output block.
# ---------------------------------------------------------------------------
def _attn_out_kernel(q_ref, k_ref, v_ref, wo_ref, b_ref, o_ref,
                     *, heads, dim_head, scale):
    # q_ref : (1, hidden, TQ)   bf16  — this q-tile, channel-major
    # k_ref : (1, N, hidden)    bf16  — all keys, row-major (constant over q-tiles)
    # v_ref : (1, hidden, N)    bf16  — all values, channel-major (constant over q-tiles)
    # wo_ref: (C, hidden)       bf16  — w_out as-is (no transpose needed)
    # b_ref : (C, 1)            f32
    # o_ref : (1, C, TQ)        output dtype (lane-dense, maps straight to NCHW)
    k = k_ref[0]                                            # (N, hidden)
    hidden = heads * dim_head

    outs = []
    for h in range(heads):                                  # static, unrolled
        lo, hi = h * dim_head, (h + 1) * dim_head
        qh_t = q_ref[0, lo:hi, :]                           # (dh, TQ) row slice (clean)
        vh_t = v_ref[0, lo:hi, :]                           # (dh, N)  row slice (clean)
        kh = k[:, lo:hi]                                    # (N, dh)  32-lane slice

        # sim_t[j, i] = sum_d k[j,d] q[i,d]  -> (N, TQ), f32 accumulation on MXU.
        sim_t = jnp.dot(kh, qh_t, preferred_element_type=jnp.float32) * scale

        # Softmax over keys = axis 0 (sublane reduction -> VPU, XLU stays free);
        # divide goes to the EUP via pl.reciprocal.
        m = jnp.max(sim_t, axis=0, keepdims=True)           # (1, TQ)
        p = jnp.exp(sim_t - m)
        l = jnp.sum(p, axis=0, keepdims=True)               # (1, TQ)
        p = (p * pl.reciprocal(l, approx=True)).astype(jnp.bfloat16)

        # out_h^T = V_h^T @ P^T : (dh, N) @ (N, TQ) -> (dh, TQ), no transposes.
        outs.append(jnp.dot(vh_t, p, preferred_element_type=jnp.float32))

    # Head-major stack along sublanes (aligned 32-row blocks), then one wide
    # output projection: (C, hidden) @ (hidden, TQ) + bias.
    out_all_t = jnp.concatenate(outs, axis=0).astype(jnp.bfloat16)      # (hidden, TQ)
    res_t = jnp.dot(wo_ref[...], out_all_t,
                    preferred_element_type=jnp.float32) + b_ref[...]    # (C, TQ) f32
    o_ref[0] = res_t.astype(o_ref.dtype)

    # TODO(synk): for very large N (v7x, 64 MiB VMEM) switch to an online-softmax
    # KV-tile loop (m/l/acc) so the (N, TQ) sim buffer and the full K/V blocks
    # are capped at O(TQ*TK); also single-buffer the constant K/V blocks
    # (pipeline_mode=pl.Buffered(1)) once N*hidden gets large.


def _pick_lane_tile(n, target):
    """Largest multiple of 128 dividing n and <= target; else n (full block)."""
    t = (min(target, n) // 128) * 128
    while t >= 128:
        if n % t == 0:
            return t
        t -= 128
    return n


def _vmem_cap_bytes():
    """Per-generation VMEM budget: ~3/4 of physical, capped (v7x ~48 MiB,
    v5e/v6e ~96 MiB).  Falls back to a universally safe 48 MiB."""
    try:
        phys = int(pltpu.get_tpu_info().vmem_capacity_bytes)
    except Exception:
        return 48 * 1024 * 1024
    return max(32 * 1024 * 1024, min((phys * 3) // 4, 100 * 1024 * 1024))


def attention2d(x_nchw, params, heads, dim_head, *, n_tile=1024, q_tile=128):
    B, C, H, W = x_nchw.shape
    N = H * W
    hidden = heads * dim_head
    out_dtype = x_nchw.dtype

    # NCHW -> channel-major (B, C, N): a pure reshape, no transpose.
    x = x_nchw.reshape(B, C, N)

    # Fold RMSNorm's sqrt(C) * g into the QKV projection weight:
    #   W @ (x_hat * sqrt(C) * g)  ==  (W * (sqrt(C)*g)[None, :]) @ x_hat
    g = params["g"].astype(jnp.float32)                                  # (C,)
    w_qkv = params["w_qkv"].astype(jnp.float32)                          # (3*hidden, C)
    w_fused = (w_qkv * ((C ** 0.5) * g)[None, :]).astype(jnp.bfloat16)   # (3H, C)

    wo = params["w_out"].astype(jnp.float32).astype(jnp.bfloat16)        # (C, hidden)
    bo = params["b_out"].astype(jnp.float32).reshape(C, 1)

    vmem_cap = _vmem_cap_bytes()

    # ---- Kernel 1: RMSNorm + fused QKV projection (HBM-bound -> big tiles) --
    tn = _pick_lane_tile(N, n_tile)
    q_t, k_rm, v_t = pl.pallas_call(
        functools.partial(_norm_qkv_kernel, hidden=hidden, eps=1e-12),
        out_shape=(jax.ShapeDtypeStruct((B, hidden, N), jnp.bfloat16),   # Q (ch-major)
                   jax.ShapeDtypeStruct((B, N, hidden), jnp.bfloat16),   # K (row-major)
                   jax.ShapeDtypeStruct((B, hidden, N), jnp.bfloat16)),  # V (ch-major)
        grid_spec=pltpu.PrefetchScalarGridSpec(
            num_scalar_prefetch=0,
            grid=(B, N // tn),
            in_specs=[
                pl.BlockSpec((1, C, tn), lambda b, i: (b, 0, i)),        # x slab
                pl.BlockSpec((3 * hidden, C), lambda b, i: (0, 0)),      # fused weight
            ],
            out_specs=[
                pl.BlockSpec((1, hidden, tn), lambda b, i: (b, 0, i)),
                pl.BlockSpec((1, tn, hidden), lambda b, i: (b, i, 0)),
                pl.BlockSpec((1, hidden, tn), lambda b, i: (b, 0, i)),
            ],
        ),
        compiler_params=pltpu.CompilerParams(
            dimension_semantics=("parallel", "parallel"),
            vmem_limit_bytes=vmem_cap),
    )(x, w_fused)

    # ---- Kernel 2: attention (q-tiled) + output projection -------------------
    tq = _pick_lane_tile(N, q_tile)
    # Keep total grid >= 2 so both v7x TensorCores get work even at B == 1.
    if B * (N // tq) < 2 and tq % 256 == 0:
        tq //= 2
    out = pl.pallas_call(
        functools.partial(_attn_out_kernel, heads=heads, dim_head=dim_head,
                          scale=dim_head ** -0.5),
        out_shape=jax.ShapeDtypeStruct((B, C, N), out_dtype),
        grid_spec=pltpu.PrefetchScalarGridSpec(
            num_scalar_prefetch=0,
            grid=(B, N // tq),
            in_specs=[
                pl.BlockSpec((1, hidden, tq), lambda b, i: (b, 0, i)),   # q tile
                pl.BlockSpec((1, N, hidden), lambda b, i: (b, 0, 0)),    # K (const over i)
                pl.BlockSpec((1, hidden, N), lambda b, i: (b, 0, 0)),    # V (const over i)
                pl.BlockSpec((C, hidden), lambda b, i: (0, 0)),          # w_out
                pl.BlockSpec((C, 1), lambda b, i: (0, 0)),               # bias
            ],
            out_specs=pl.BlockSpec((1, C, tq), lambda b, i: (b, 0, i)),  # lane-dense
        ),
        compiler_params=pltpu.CompilerParams(
            dimension_semantics=("parallel", "parallel"),
            vmem_limit_bytes=vmem_cap),
    )(q_t, k_rm, v_t, wo, bo)

    # (B, C, N) is already NCHW layout — just reshape.
    return out.reshape(B, C, H, W)
    # TODO(synk): for small N both kernels are launch/DMA-latency bound; a
    # single fused kernel (norm+QKV on the first q-tile of each batch element
    # into persistent VMEM scratch) would remove the HBM round-trip of Q/K/V.


def attention2d_ref(x_nchw, params, heads, dim_head):
    """Pure-JAX (f32) reference matching the PyTorch forward (eval mode)."""
    B, C, H, W = x_nchw.shape
    hidden = heads * dim_head
    x = x_nchw.astype(jnp.float32)
    g = params["g"]
    norm = jnp.sqrt(jnp.sum(x * x, axis=1, keepdims=True))
    xn = x / jnp.maximum(norm, 1e-12) * (C ** 0.5) * g[None, :, None, None]
    qkv = jnp.einsum("oc,bchw->bohw", params["w_qkv"], xn)
    q, k, v = jnp.split(qkv, 3, axis=1)

    def re(t):  # 'b (h c) x y -> b h (x y) c'
        return t.reshape(B, heads, dim_head, H * W).transpose(0, 1, 3, 2)

    q, k, v = map(re, (q, k, v))
    sim = jnp.einsum("bhid,bhjd->bhij", q, k) * (dim_head ** -0.5)
    attn = jax.nn.softmax(sim, axis=-1)
    out = jnp.einsum("bhij,bhjd->bhid", attn, v)
    out = out.transpose(0, 1, 3, 2).reshape(B, hidden, H, W)
    return (jnp.einsum("oc,bchw->bohw", params["w_out"], out)
            + params["b_out"][None, :, None, None])


if __name__ == "__main__":
    key = jax.random.PRNGKey(0)
    B, C, H, W = 2, 32, 16, 16          # dim = 32
    heads, dim_head = 4, 32             # module defaults -> hidden = 128
    hidden = heads * dim_head

    k1, k2, k3, k4, k5 = jax.random.split(key, 5)
    x = jax.random.normal(k1, (B, C, H, W), jnp.float32)
    params = {
        "g": 1.0 + 0.1 * jax.random.normal(k5, (C,), jnp.float32),               # RMSNorm gain
        "w_qkv": jax.random.normal(k2, (3 * hidden, C), jnp.float32) / (C ** 0.5),
        "w_out": jax.random.normal(k3, (C, hidden), jnp.float32) / (hidden ** 0.5),
        "b_out": 0.01 * jax.random.normal(k4, (C,), jnp.float32),
    }

    y = jax.block_until_ready(attention2d(x, params, heads, dim_head))
    assert y.shape == (B, C, H, W)

    y_ref = attention2d_ref(x, params, heads, dim_head)
    err = float(jnp.max(jnp.abs(y - y_ref)))
    # bf16 MXU operands (f32 accumulation / f32 softmax stats) -> bf16-level tolerance.
    if not err < 1e-1:
        raise SystemExit(f"mismatch vs reference: max abs err = {err}")
    print("KERNEL_OK")
</pallas_src>

<mosaic_0001>
module attributes {stable_mosaic.version = 11 : i64} {
  func.func @_norm_qkv_kernel(%arg0: i32, %arg1: i32, %arg2: memref<1x32x256xf32, #tpu.memory_space<vmem>>, %arg3: memref<384x32xbf16, #tpu.memory_space<vmem>>, %arg4: memref<1x128x256xbf16, #tpu.memory_space<vmem>>, %arg5: memref<1x256x128xbf16, #tpu.memory_space<vmem>>, %arg6: memref<1x128x256xbf16, #tpu.memory_space<vmem>>) attributes {dimension_semantics = [#tpu.dimension_semantics<parallel>, #tpu.dimension_semantics<parallel>], iteration_bounds = array<i64: 2, 1>, scalar_prefetch = 0 : i64, scratch_operands = 0 : i64, tpu.core_type = #tpu.core_type<tc>, window_params = [{transform_indices = @transform_0, window_bounds = array<i64: 1, 32, 256>}, {pipeline_mode = #tpu.pipeline_mode<synchronous>, transform_indices = @transform_1, window_bounds = array<i64: 384, 32>}, {transform_indices = @transform_2, window_bounds = array<i64: 1, 128, 256>}, {transform_indices = @transform_3, window_bounds = array<i64: 1, 256, 128>}, {transform_indices = @transform_4, window_bounds = array<i64: 1, 128, 256>}]} {
    %c0 = arith.constant 0 : index
    %c0_0 = arith.constant 0 : index
    %c0_1 = arith.constant 0 : index
    %0 = vector.load %arg2[%c0, %c0_0, %c0_1] : memref<1x32x256xf32, #tpu.memory_space<vmem>>, vector<1x32x256xf32>
    %1 = vector.shape_cast %0 : vector<1x32x256xf32> to vector<32x256xf32>
    %2 = arith.mulf %1, %1 : vector<32x256xf32>
    %cst = arith.constant dense<0.000000e+00> : vector<256xf32>
    %3 = vector.multi_reduction <add>, %2, %cst [0] : vector<32x256xf32> to vector<256xf32>
    %4 = vector.shape_cast %3 : vector<256xf32> to vector<1x256xf32>
    %cst_2 = arith.constant 1.000000e-24 : f32
    %5 = vector.broadcast %cst_2 : f32 to vector<1x256xf32>
    %6 = arith.maximumf %4, %5 : vector<1x256xf32>
    %7 = math.rsqrt %6 : vector<1x256xf32>
    %8 = vector.broadcast %7 : vector<1x256xf32> to vector<32x256xf32>
    %9 = arith.mulf %1, %8 : vector<32x256xf32>
    %10 = arith.truncf %9 : vector<32x256xf32> to vector<32x256xbf16>
    %c0_3 = arith.constant 0 : index
    %c0_4 = arith.constant 0 : index
    %11 = vector.load %arg3[%c0_3, %c0_4] : memref<384x32xbf16, #tpu.memory_space<vmem>>, vector<384x32xbf16>
    %cst_5 = arith.constant dense<0.000000e+00> : vector<384x256xf32>
    %12 = tpu.matmul %11, %10, %cst_5 {dimension_numbers = #tpu.dot_dimension_numbers<[1], [0], [0], [1], [0, 0, 1, 1], [], []>} : vector<384x32xbf16>, vector<32x256xbf16>, vector<384x256xf32> -> vector<384x256xf32>
    %13 = vector.extract_strided_slice %12 {offsets = [0, 0], sizes = [128, 256], strides = [1, 1]} : vector<384x256xf32> to vector<128x256xf32>
    %14 = arith.truncf %13 : vector<128x256xf32> to vector<128x256xbf16>
    %c0_6 = arith.constant 0 : index
    %c0_7 = arith.constant 0 : index
    %c0_8 = arith.constant 0 : index
    %15 = vector.load %arg4[%c0_6, %c0_7, %c0_8] : memref<1x128x256xbf16, #tpu.memory_space<vmem>>, vector<1x128x256xbf16>
    %16 = vector.shape_cast %15 : vector<1x128x256xbf16> to vector<128x256xbf16>
    %17 = vector.shape_cast %14 : vector<128x256xbf16> to vector<1x128x256xbf16>
    tpu.vector_store %arg4[%c0_6, %c0_7, %c0_8], %17 {strides = array<i32>} : memref<1x128x256xbf16, #tpu.memory_space<vmem>>, vector<1x128x256xbf16>,
    %18 = vector.extract_strided_slice %12 {offsets = [256, 0], sizes = [128, 256], strides = [1, 1]} : vector<384x256xf32> to vector<128x256xf32>
    %19 = arith.truncf %18 : vector<128x256xf32> to vector<128x256xbf16>
    %c0_9 = arith.constant 0 : index
    %c0_10 = arith.constant 0 : index
    %c0_11 = arith.constant 0 : index
    %20 = vector.load %arg6[%c0_9, %c0_10, %c0_11] : memref<1x128x256xbf16, #tpu.memory_space<vmem>>, vector<1x128x256xbf16>
    %21 = vector.shape_cast %20 : vector<1x128x256xbf16> to vector<128x256xbf16>
    %22 = vector.shape_cast %19 : vector<128x256xbf16> to vector<1x128x256xbf16>
    tpu.vector_store %arg6[%c0_9, %c0_10, %c0_11], %22 {strides = array<i32>} : memref<1x128x256xbf16, #tpu.memory_space<vmem>>, vector<1x128x256xbf16>,
    %23 = vector.extract_strided_slice %12 {offsets = [128, 0], sizes = [128, 256], strides = [1, 1]} : vector<384x256xf32> to vector<128x256xf32>
    %24 = tpu.transpose %23, [1, 0] : vector<128x256xf32> -> vector<256x128xf32>
    %25 = arith.truncf %24 : vector<256x128xf32> to vector<256x128xbf16>
    %c0_12 = arith.constant 0 : index
    %c0_13 = arith.constant 0 : index
    %c0_14 = arith.constant 0 : index
    %26 = vector.load %arg5[%c0_12, %c0_13, %c0_14] : memref<1x256x128xbf16, #tpu.memory_space<vmem>>, vector<1x256x128xbf16>
    %27 = vector.shape_cast %26 : vector<1x256x128xbf16> to vector<256x128xbf16>
    %28 = vector.shape_cast %25 : vector<256x128xbf16> to vector<1x256x128xbf16>
    tpu.vector_store %arg5[%c0_12, %c0_13, %c0_14], %28 {strides = array<i32>} : memref<1x256x128xbf16, #tpu.memory_space<vmem>>, vector<1x256x128xbf16>,
    return
  }
  func.func @transform_0(%arg0: i32, %arg1: i32) -> (i32, i32, i32) {
    %c0_i32 = arith.constant 0 : i32
    %c0_i32_0 = arith.constant 0 : i32
    return %arg0, %c0_i32, %arg1 : i32, i32, i32
  }
  func.func @transform_1(%arg0: i32, %arg1: i32) -> (i32, i32) {
    %c0_i32 = arith.constant 0 : i32
    %c0_i32_0 = arith.constant 0 : i32
    %c0_i32_1 = arith.constant 0 : i32
    return %c0_i32, %c0_i32_0 : i32, i32
  }
  func.func @transform_2(%arg0: i32, %arg1: i32) -> (i32, i32, i32) {
    %c0_i32 = arith.constant 0 : i32
    %c0_i32_0 = arith.constant 0 : i32
    return %arg0, %c0_i32, %arg1 : i32, i32, i32
  }
  func.func @transform_3(%arg0: i32, %arg1: i32) -> (i32, i32, i32) {
    %c0_i32 = arith.constant 0 : i32
    %c0_i32_0 = arith.constant 0 : i32
    return %arg0, %arg1, %c0_i32 : i32, i32, i32
  }
  func.func @transform_4(%arg0: i32, %arg1: i32) -> (i32, i32, i32) {
    %c0_i32 = arith.constant 0 : i32
    %c0_i32_0 = arith.constant 0 : i32
    return %arg0, %c0_i32, %arg1 : i32, i32, i32
  }
}

</mosaic_0001>

<llo_original>
// kernel: tpu_custom_call.1
$region0: #{tpu_custom_call.1}
  #allocation0 [shape = 'u32[]', space=smem, size = 0x4, offset = 0x4, fixed_abs, tag = 'smem constant byte address 0x4 - core index']
  #allocation1 [shape = 'u32[72,128]{1,0:T(1,128)}', space=vmem, size = 0x9000, scoped, tag = 'internal scratch']
  %s0 = inlined_call_operand.vmem [shape: f32[2,32,256], index: 0, kind: input, shape index: {}]
  %s1 = inlined_call_operand.vmem [shape: bf16[384,32], index: 1, kind: input, shape index: {}]
  %s2 = inlined_call_operand.hbm [shape: bf16[2,128,256], index: 2, kind: output, shape index: {0}]
  %s3 = inlined_call_operand.hbm [shape: bf16[2,256,128], index: 3, kind: output, shape index: {1}]
  %s4 = inlined_call_operand.hbm [shape: bf16[2,128,256], index: 4, kind: output, shape index: {2}]
  %5 = xla_tuple %s2, %s3, %s4
  %s6 = sld [smem:[#allocation0]]
  $region57: #{tpu_custom_call.1} parent=0
    _
  %s8 = ssub.s32 1, %s6
  %s9 = scalar_select 0, %s8, %s6
  $region1: #{tpu_custom_call.1} parent=0
    #allocation2 [shape = 'u8[131072]{0}', space=vmem, size = 0x20000, scoped, tag = 'output window, operand 0']
    #allocation3 [shape = 's32[2]{0}', space=sflag, size = 0x8, scoped, tag = 'scoped memory for tpu_custom_call.1']
    #allocation4 [shape = 'u8[131072]{0}', space=vmem, size = 0x20000, scoped, tag = 'output window, operand 1']
    #allocation5 [shape = 's32[2]{0}', space=sflag, size = 0x8, scoped, tag = 'scoped memory for tpu_custom_call.1']
    #allocation6 [shape = 'u8[131072]{0}', space=vmem, size = 0x20000, scoped, tag = 'output window, operand 2']
    %10 = vsyncpa [#allocation3], 0
    %s11 = scalar_lea.sflag [#allocation3], 1
    %12 = vsyncpa %s11, 0
    %13 = vsyncpa [#allocation5], 0
    %s14 = scalar_lea.sflag [#allocation5], 1
    %15 = vsyncpa %s14, 0
    loop: start=0, step=1, limit=4
    $region2: #{tpu_custom_call.1} parent=1 // loop_pre_header
      _
    $region3: #{tpu_custom_call.1} parent=1 // loop_header
      %s17 = sphi 0, %s21
      %p18 = scmp.ge.s32.totalorder %s17, 4
      %s24 = sphi 0, %s36
      %s25 = sphi 0, %s32
      %s26 = sphi 0, %s24
      %s27 = sphi 0, %s25
      %s28 = sphi 0, %s26
      %s29 = sphi 0, %s27
      %s41 = sphi 0, %s43
      %s44 = sphi 0, %s41
      %s45 = sphi 0, %s44
      %s61 = sphi 0, %s45
      %s65 = sphi 0, %s65
      %s67 = sphi 0, %s65
      %s68 = sphi 0, %s67
      %s82 = sphi 0, %s68
      %s90 = sphi 0, %s92
      %s93 = sphi 0, %s90
      %s94 = sphi 0, %s93
      %s110 = sphi 0, %s94
      %s118 = sphi 0, %s120
      %s121 = sphi 0, %s118
      %s122 = sphi 0, %s121
      %s138 = sphi 0, %s122
      %s146 = sphi 0, %s148
      %s149 = sphi 0, %s146
      %s150 = sphi 0, %s149
      %s166 = sphi 0, %s150
    $region4: #{tpu_custom_call.1} parent=1 // loop_header_branch
      %20 = sbr.rel (%p18) target = $region8
    $region5: #{tpu_custom_call.1} parent=1 // loop_body
      %s22 = ssub.s32 %s17, 1
      %s23 = ssub.s32 %s17, 2
      %s30 = sadd.s32 1, %s25
      %p31 = scmp.ge.s32.totalorder %s30, 1
      %s32 = scalar_select %p31, 0, %s30
      %s33 = sadd.s32 1, %s24
      %s34 = scalar_select %p31, %s33, %s24
      %p35 = scmp.ge.s32.totalorder %s34, 2
      %s36 = scalar_select %p35, 0, %s34
      %s37 = ssub.s32 %s24, %s36
      %s38 = ssub.s32 %s25, %s32
      %s39 = sor.u32 %s37, %s38
      %p40 = scmp.eq.s32.totalorder %s39, 0
      %s42 = sadd.s32 %s41, 1
      %s43 = scalar_select %p40, %s41, %s42
      %p46 = pneg %p40
      %p47 = scmp.eq.s32.totalorder %s17, 1
      %p48 = por %p46, %p47
      %p49 = scmp.ne.s32.totalorder %s41, %s44
      %p50 = scmp.eq.s32.totalorder %s17, 0
      %p51 = por %p49, %p50
      %p52 = scmp.ne.s32.totalorder %s41, %s44
      %p53 = scmp.eq.s32.totalorder %s22, 1
      %p54 = por %p52, %p53
      %p55 = scmp.ne.s32.totalorder %s44, %s45
      %p56 = scmp.eq.s32.totalorder %s22, 0
      %p57 = por %p55, %p56
      %p58 = scmp.ne.s32.totalorder %s44, %s45
      %p59 = scmp.eq.s32.totalorder %s23, 1
      %p60 = por %p58, %p59
      %p62 = scmp.ne.s32.totalorder %s45, %s61
      %p63 = scmp.eq.s32.totalorder %s23, 0
      %p64 = por %p62, %p63
      %s66 = sadd.s32 %s65, 1
      %p69 = scmp.eq.s32.totalorder %s17, 1
      %p70 = scmp.ne.s32.totalorder %s65, %s67
      %p71 = scmp.eq.s32.totalorder %s17, 0
      %p72 = por %p70, %p71
      %p73 = scmp.ne.s32.totalorder %s65, %s67
      %p74 = scmp.eq.s32.totalorder %s22, 1
      %p75 = por %p73, %p74
      %p76 = scmp.ne.s32.totalorder %s67, %s68
      %p77 = scmp.eq.s32.totalorder %s22, 0
      %p78 = por %p76, %p77
      %p79 = scmp.ne.s32.totalorder %s67, %s68
      %p80 = scmp.eq.s32.totalorder %s23, 1
      %p81 = por %p79, %p80
      %p83 = scmp.ne.s32.totalorder %s68, %s82
      %p84 = scmp.eq.s32.totalorder %s23, 0
      %p85 = por %p83, %p84
      %s86 = ssub.s32 %s24, %s36
      %s87 = ssub.s32 %s25, %s32
      %s88 = sor.u32 %s86, %s87
      %p89 = scmp.eq.s32.totalorder %s88, 0
      %s91 = sadd.s32 %s90, 1
      %s92 = scalar_select %p89, %s90, %s91
      %p95 = pneg %p89
      %p96 = scmp.eq.s32.totalorder %s17, 1
      %p97 = por %p95, %p96
      %p98 = scmp.ne.s32.totalorder %s90, %s93
      %p99 = scmp.eq.s32.totalorder %s17, 0
      %p100 = por %p98, %p99
      %p101 = scmp.ne.s32.totalorder %s90, %s93
      %p102 = scmp.eq.s32.totalorder %s22, 1
      %p103 = por %p101, %p102
      %p104 = scmp.ne.s32.totalorder %s93, %s94
      %p105 = scmp.eq.s32.totalorder %s22, 0
      %p106 = por %p104, %p105
      %p107 = scmp.ne.s32.totalorder %s93, %s94
      %p108 = scmp.eq.s32.totalorder %s23, 1
      %p109 = por %p107, %p108
      %p111 = scmp.ne.s32.totalorder %s94, %s110
      %p112 = scmp.eq.s32.totalorder %s23, 0
      %p113 = por %p111, %p112
      %s114 = ssub.s32 %s24, %s36
      %s115 = ssub.s32 %s25, %s32
      %s116 = sor.u32 %s114, %s115
      %p117 = scmp.eq.s32.totalorder %s116, 0
      %s119 = sadd.s32 %s118, 1
      %s120 = scalar_select %p117, %s118, %s119
      %p123 = pneg %p117
      %p124 = scmp.eq.s32.totalorder %s17, 1
      %p125 = por %p123, %p124
      %p126 = scmp.ne.s32.totalorder %s118, %s121
      %p127 = scmp.eq.s32.totalorder %s17, 0
      %p128 = por %p126, %p127
      %p129 = scmp.ne.s32.totalorder %s118, %s121
      %p130 = scmp.eq.s32.totalorder %s22, 1
      %p131 = por %p129, %p130
      %p132 = scmp.ne.s32.totalorder %s121, %s122
      %p133 = scmp.eq.s32.totalorder %s22, 0
      %p134 = por %p132, %p133
      %p135 = scmp.ne.s32.totalorder %s121, %s122
      %p136 = scmp.eq.s32.totalorder %s23, 1
      %p137 = por %p135, %p136
      %p139 = scmp.ne.s32.totalorder %s122, %s138
      %p140 = scmp.eq.s32.totalorder %s23, 0
      %p141 = por %p139, %p140
      %s142 = ssub.s32 %s24, %s36
      %s143 = ssub.s32 %s25, %s32
      %s144 = sor.u32 %s142, %s143
      %p145 = scmp.eq.s32.totalorder %s144, 0
      %s147 = sadd.s32 %s146, 1
      %s148 = scalar_select %p145, %s146, %s147
      %p151 = pneg %p145
      %p152 = scmp.eq.s32.totalorder %s17, 1
      %p153 = por %p151, %p152
      %p154 = scmp.ne.s32.totalorder %s146, %s149
      %p155 = scmp.eq.s32.totalorder %s17, 0
      %p156 = por %p154, %p155
      %p157 = scmp.ne.s32.totalorder %s146, %s149
      %p158 = scmp.eq.s32.totalorder %s22, 1
      %p159 = por %p157, %p158
      %p160 = scmp.ne.s32.totalorder %s149, %s150
      %p161 = scmp.eq.s32.totalorder %s22, 0
      %p162 = por %p160, %p161
      %p163 = scmp.ne.s32.totalorder %s149, %s150
      %p164 = scmp.eq.s32.totalorder %s23, 1
      %p165 = por %p163, %p164
      %p167 = scmp.ne.s32.totalorder %s150, %s166
      %p168 = scmp.eq.s32.totalorder %s23, 0
      %p169 = por %p167, %p168
      %p170 = scmp.le.s32.totalorder 1, %s17
      %p171 = scmp.lt.s32.totalorder %s17, 3
      %p172 = pnand %p170, %p171
      %p173 = pneg %p172
      // Predicated region
      $region9: #{tpu_custom_call.1} parent=5 // pred_check
        _
      $region10: #{tpu_custom_call.1} parent=5 // pred_check_branch
        %175 = sbr.rel (%p172) target = $region12
      $region11: #{tpu_custom_call.1} parent=5 // pred_region
        %s176 = ssub.s32 %s17, 1
        // Predicated region
        $region13: #{tpu_custom_call.1} parent=11 // pred_check
          %p177 = pneg %p78
        $region14: #{tpu_custom_call.1} parent=11 // pred_check_branch
          %179 = sbr.rel (%p177) target = $region16
        $region15: #{tpu_custom_call.1} parent=11 // pred_region
          _
        $region16: #{tpu_custom_call.1} parent=11 // pred_fallthru
          _
      $region12: #{tpu_custom_call.1} parent=5 // pred_fallthru
        _
      %p180 = scmp.lt.s32.totalorder %s17, 2
      // Predicated region
      $region17: #{tpu_custom_call.1} parent=5 // pred_check
        %p181 = pneg %p180
      $region18: #{tpu_custom_call.1} parent=5 // pred_check_branch
        %183 = sbr.rel (%p181) target = $region20
      $region19: #{tpu_custom_call.1} parent=5 // pred_region
        // Predicated region
        $region21: #{tpu_custom_call.1} parent=19 // pred_check
          %p184 = pneg %p51
        $region22: #{tpu_custom_call.1} parent=19 // pred_check_branch
          %186 = sbr.rel (%p184) target = $region24
        $region23: #{tpu_custom_call.1} parent=19 // pred_region
          %s187 = smul.u32 2, %s25
          %p188 = scmp.lt.s32.totalorder %s24, 1
          %s189 = scalar_select %p188, %s24, 1
          %p190 = scmp.lt.s32.totalorder %s187, 1
          %s191 = scalar_select %p190, %s187, 1
          %s192 = smul.addr %s189, 8
          %s193 = sadd.s32 %s191, %s192
          %s194 = smul.addr %s193, 8
          %s195 = scalar_lea.vmem %s0, %s194
          %s196 = smul.u32 2, %s25
        $region24: #{tpu_custom_call.1} parent=19 // pred_fallthru
          _
      $region20: #{tpu_custom_call.1} parent=5 // pred_fallthru
        _
      %p197 = scmp.le.s32.totalorder 1, %s17
      %p198 = scmp.lt.s32.totalorder %s17, 3
      %p199 = pnand %p197, %p198
      %p200 = pneg %p199
      // Predicated region
      $region25: #{tpu_custom_call.1} parent=5 // pred_check
        _
      $region26: #{tpu_custom_call.1} parent=5 // pred_check_branch
        %202 = sbr.rel (%p199) target = $region28
      $region27: #{tpu_custom_call.1} parent=5 // pred_region
        %s203 = ssub.s32 %s17, 1
        %s204 = smul.u32 2, %s27
        %p205 = scmp.lt.s32.totalorder %s26, 1
        %s206 = scalar_select %p205, %s26, 1
        %p207 = scmp.lt.s32.totalorder %s204, 1
        %s208 = scalar_select %p207, %s204, 1
        %s209 = smul.addr %s206, 8
        %s210 = sadd.s32 %s208, %s209
        %s211 = smul.addr %s210, 8
        %s212 = scalar_lea.vmem %s0, %s211
        %p213 = pneg %p57
        %p214 = pneg %p54
        %p215 = pneg %p78
        %p216 = pneg %p75
        %p217 = pneg %p106
        %p218 = pneg %p103
        %s219 = sand.u32 %s93, 1
        %s220 = scalar_lea.sflag [#allocation3], %s219
        %s221 = sand.u32 %s93, 1
        %s222 = smul.addr %s221, 128
        %s223 = scalar_lea.vmem [#allocation2], %s222
        %p224 = pneg %p134
        %p225 = pneg %p131
        %s226 = sand.u32 %s22, 1
        %s227 = scalar_lea.sflag [#allocation5], %s226
        %s228 = sand.u32 %s121, 1
        %s229 = smul.addr %s228, 128
        %s230 = scalar_lea.vmem [#allocation4], %s229
        %p231 = pneg %p162
        %p232 = pneg %p159
        %s233 = sand.u32 %s22, 1
        %s234 = scalar_lea.sflag [#allocation5], %s233
        %s235 = sand.u32 %s149, 1
        %s236 = smul.addr %s235, 128
        %s237 = scalar_lea.vmem [#allocation6], %s236
        %s238 = smul.u32 2, %s27
        %p239 = scmp.lt.s32.totalorder %s26, 1
        %s240 = scalar_select %p239, %s26, 1
        %p241 = scmp.lt.s32.totalorder %s238, 1
        %s242 = scalar_select %p241, %s238, 1
        %s243 = smul.addr %s240, 8
        %s244 = sadd.s32 %s242, %s243
        %s245 = smul.addr %s244, 8
        %s246 = scalar_lea.vmem %s0, %s245
        %s247 = smul.u32 2, %s27
        %s248 = smul.u32 2, %s27
        %s249 = smul.u32 32, %s27
        %s250 = smul.u32 2, %s27
        %v252 = vld [vmem:[%s246] sm:$0xff]
        %v253 = vld [vmem:[%s246 + $0x8] sm:$0xff]
        %v254 = vld [vmem:[%s246 + $0x10] sm:$0xff]
        %v255 = vld [vmem:[%s246 + $0x18] sm:$0xff]
        %v256 = vld [vmem:[%s246 + $0x20] sm:$0xff]
        %v257 = vld [vmem:[%s246 + $0x28] sm:$0xff]
        %v258 = vld [vmem:[%s246 + $0x30] sm:$0xff]
        %v259 = vld [vmem:[%s246 + $0x38] sm:$0xff]
        %v260 = vmul.f32 %v252, %v252
        %v261 = vmul.f32 %v253, %v253
        %v262 = vmul.f32 %v254, %v254
        %v263 = vmul.f32 %v255, %v255
        %v264 = vmul.f32 %v256, %v256
        %v265 = vmul.f32 %v257, %v257
        %v266 = vmul.f32 %v258, %v258
        %v267 = vmul.f32 %v259, %v259
        %v268 = vadd.f32 %v260, %v262
        %v269 = vadd.f32 %v268, %v264
        %v270 = vadd.f32 %v269, %v266
        %v271 = vrot.slane %v270, 4
        %v272 = vadd.f32 %v270, %v271
        %v273 = vrot.slane %v272, 2
        %v274 = vadd.f32 %v272, %v273
        %v275 = vrot.slane %v274, 1
        %v276 = vadd.f32 %v274, %v275
        %v277 = vadd.f32 %v261, %v263
        %v278 = vadd.f32 %v277, %v265
        %v279 = vadd.f32 %v278, %v267
        %v280 = vrot.slane %v279, 4
        %v281 = vadd.f32 %v279, %v280
        %v282 = vrot.slane %v281, 2
        %v283 = vadd.f32 %v281, %v282
        %v284 = vrot.slane %v283, 1
        %v285 = vadd.f32 %v283, %v284
        %v286 = vmax.f32 %v276, 1e-24
        %v287 = vmax.f32 %v285, 1e-24
        %v288 = vrsqrt.pop %v286
        %v289 = vmul.f32 %v288, %v286
        %v290 = vmul.f32 %v289, %v288
        %v291 = vmul.f32 0.5, %v290
        %v292 = vsub.f32 1.5, %v291
        %v293 = vmul.f32 %v288, %v292
        %vm294 = vweird.f32 %v286
        %vm295 = vweird.f32 %v288
        %vm296 = vmor %vm294, %vm295
        %v297 = vsel %vm296, %v288, %v293
        %v298 = vrsqrt.pop %v287
        %v299 = vmul.f32 %v298, %v287
        %v300 = vmul.f32 %v299, %v298
        %v301 = vmul.f32 0.5, %v300
        %v302 = vsub.f32 1.5, %v301
        %v303 = vmul.f32 %v298, %v302
        %vm304 = vweird.f32 %v287
        %vm305 = vweird.f32 %v298
        %vm306 = vmor %vm304, %vm305
        %v307 = vsel %vm306, %v298, %v303
        %v308 = vmul.f32 %v252, %v297
        %v309 = vmul.f32 %v253, %v307
        %v310 = vmul.f32 %v254, %v297
        %v311 = vmul.f32 %v255, %v307
        %v312 = vmul.f32 %v256, %v297
        %v313 = vmul.f32 %v257, %v307
        %v314 = vmul.f32 %v258, %v297
        %v315 = vmul.f32 %v259, %v307
        %v316 = vpack.c.bf16 %v310, %v308
        %v317 = vpack.c.bf16 %v311, %v309
        %v318 = vpack.c.bf16 %v314, %v312
        %v319 = vpack.c.bf16 %v315, %v313
        %v320 = vld [vmem:[%s1] sm:$0xf]
        %v321 = vld [vmem:[%s1 + $0x4] sm:$0xf]
        %v322 = vld [vmem:[%s1 + $0x8] sm:$0xf]
        %v323 = vld [vmem:[%s1 + $0xc] sm:$0xf]
        %v324 = vld [vmem:[%s1 + $0x10] sm:$0xf]
        %v325 = vld [vmem:[%s1 + $0x14] sm:$0xf]
        %v326 = vld [vmem:[%s1 + $0x18] sm:$0xf]
        %v327 = vld [vmem:[%s1 + $0x1c] sm:$0xf]
        %v328 = vld [vmem:[%s1 + $0x20] sm:$0xf]
        %v329 = vld [vmem:[%s1 + $0x24] sm:$0xf]
        %v330 = vld [vmem:[%s1 + $0x28] sm:$0xf]
        %v331 = vld [vmem:[%s1 + $0x2c] sm:$0xf]
        %v332 = vld [vmem:[%s1 + $0x30] sm:$0xf]
        %v333 = vld [vmem:[%s1 + $0x34] sm:$0xf]
        %v334 = vld [vmem:[%s1 + $0x38] sm:$0xf]
        %v335 = vld [vmem:[%s1 + $0x3c] sm:$0xf]
        %v336 = vld [vmem:[%s1 + $0x40] sm:$0xf]
        %v337 = vld [vmem:[%s1 + $0x44] sm:$0xf]
        %v338 = vld [vmem:[%s1 + $0x48] sm:$0xf]
        %v339 = vld [vmem:[%s1 + $0x4c] sm:$0xf]
        %v340 = vld [vmem:[%s1 + $0x50] sm:$0xf]
        %v341 = vld [vmem:[%s1 + $0x54] sm:$0xf]
        %v342 = vld [vmem:[%s1 + $0x58] sm:$0xf]
        %v343 = vld [vmem:[%s1 + $0x5c] sm:$0xf]
        %v344 = vld [vmem:[%s1 + $0x60] sm:$0xf]
        %v345 = vld [vmem:[%s1 + $0x64] sm:$0xf]
        %v346 = vld [vmem:[%s1 + $0x68] sm:$0xf]
        %v347 = vld [vmem:[%s1 + $0x6c] sm:$0xf]
        %v348 = vld [vmem:[%s1 + $0x70] sm:$0xf]
        %v349 = vld [vmem:[%s1 + $0x74] sm:$0xf]
        %v350 = vld [vmem:[%s1 + $0x78] sm:$0xf]
        %v351 = vld [vmem:[%s1 + $0x7c] sm:$0xf]
        %v352 = vld [vmem:[%s1 + $0x80] sm:$0xf]
        %v353 = vld [vmem:[%s1 + $0x84] sm:$0xf]
        %v354 = vld [vmem:[%s1 + $0x88] sm:$0xf]
        %v355 = vld [vmem:[%s1 + $0x8c] sm:$0xf]
        %v356 = vld [vmem:[%s1 + $0x90] sm:$0xf]
        %v357 = vld [vmem:[%s1 + $0x94] sm:$0xf]
        %v358 = vld [vmem:[%s1 + $0x98] sm:$0xf]
        %v359 = vld [vmem:[%s1 + $0x9c] sm:$0xf]
        %v360 = vld [vmem:[%s1 + $0xa0] sm:$0xf]
        %v361 = vld [vmem:[%s1 + $0xa4] sm:$0xf]
        %v362 = vld [vmem:[%s1 + $0xa8] sm:$0xf]
        %v363 = vld [vmem:[%s1 + $0xac] sm:$0xf]
        %v364 = vld [vmem:[%s1 + $0xb0] sm:$0xf]
        %v365 = vld [vmem:[%s1 + $0xb4] sm:$0xf]
        %v366 = vld [vmem:[%s1 + $0xb8] sm:$0xf]
        %v367 = vld [vmem:[%s1 + $0xbc] sm:$0xf]
        %v416 = vunpack.c.l.b16 %v320
        %v417 = vunpack.c.l.b16 %v321
        %v418 = vunpack.c.l.b16 %v322
        %v419 = vunpack.c.l.b16 %v323
        %v420 = vunpack.c.l.b16 %v324
        %v421 = vunpack.c.l.b16 %v325
        %v422 = vunpack.c.l.b16 %v326
        %v423 = vunpack.c.l.b16 %v327
        %v424 = vunpack.c.l.b16 %v328
        %v425 = vunpack.c.l.b16 %v329
        %v426 = vunpack.c.l.b16 %v330
        %v427 = vunpack.c.l.b16 %v331
        %v428 = vunpack.c.l.b16 %v332
        %v429 = vunpack.c.l.b16 %v333
        %v430 = vunpack.c.l.b16 %v334
        %v431 = vunpack.c.l.b16 %v335
        %v432 = vunpack.c.l.b16 %v336
        %v433 = vunpack.c.l.b16 %v337
        %v434 = vunpack.c.l.b16 %v338
        %v435 = vunpack.c.l.b16 %v339
        %v436 = vunpack.c.l.b16 %v340
        %v437 = vunpack.c.l.b16 %v341
        %v438 = vunpack.c.l.b16 %v342
        %v439 = vunpack.c.l.b16 %v343
        %v440 = vunpack.c.l.b16 %v344
        %v441 = vunpack.c.l.b16 %v345
        %v442 = vunpack.c.l.b16 %v346
        %v443 = vunpack.c.l.b16 %v347
        %v444 = vunpack.c.l.b16 %v348
        %v445 = vunpack.c.l.b16 %v349
        %v446 = vunpack.c.l.b16 %v350
        %v447 = vunpack.c.l.b16 %v351
        %v448 = vunpack.c.l.b16 %v352
        %v449 = vunpack.c.l.b16 %v353
        %v450 = vunpack.c.l.b16 %v354
        %v451 = vunpack.c.l.b16 %v355
        %v452 = vunpack.c.l.b16 %v356
        %v453 = vunpack.c.l.b16 %v357
        %v454 = vunpack.c.l.b16 %v358
        %v455 = vunpack.c.l.b16 %v359
        %v456 = vunpack.c.l.b16 %v360
        %v457 = vunpack.c.l.b16 %v361
        %v458 = vunpack.c.l.b16 %v362
        %v459 = vunpack.c.l.b16 %v363
        %v460 = vunpack.c.l.b16 %v364
        %v461 = vunpack.c.l.b16 %v365
        %v462 = vunpack.c.l.b16 %v366
        %v463 = vunpack.c.l.b16 %v367
        %v464 = vpack.c.b16 %v417, %v416
        %v465 = vpack.c.b16 %v419, %v418
        %v466 = vpack.c.b16 %v421, %v420
        %v467 = vpack.c.b16 %v423, %v422
        %v468 = vpack.c.b16 %v425, %v424
        %v469 = vpack.c.b16 %v427, %v426
        %v470 = vpack.c.b16 %v429, %v428
        %v471 = vpack.c.b16 %v431, %v430
        %v472 = vpack.c.b16 %v433, %v432
        %v473 = vpack.c.b16 %v435, %v434
        %v474 = vpack.c.b16 %v437, %v436
        %v475 = vpack.c.b16 %v439, %v438
        %v476 = vpack.c.b16 %v441, %v440
        %v477 = vpack.c.b16 %v443, %v442
        %v478 = vpack.c.b16 %v445, %v444
        %v479 = vpack.c.b16 %v447, %v446
        %v480 = vpack.c.b16 %v449, %v448
        %v481 = vpack.c.b16 %v451, %v450
        %v482 = vpack.c.b16 %v453, %v452
        %v483 = vpack.c.b16 %v455, %v454
        %v484 = vpack.c.b16 %v457, %v456
        %v485 = vpack.c.b16 %v459, %v458
        %v486 = vpack.c.b16 %v461, %v460
        %v487 = vpack.c.b16 %v463, %v462
        %vm488 = vcmask 261120
        %v490 = vsel %vm488, %v464, 0
        %v493 = vsel %vm488, %v465, 0
        %v496 = vsel %vm488, %v466, 0
        %v499 = vsel %vm488, %v467, 0
        %v502 = vsel %vm488, %v468, 0
        %v505 = vsel %vm488, %v469, 0
        %v508 = vsel %vm488, %v470, 0
        %v511 = vsel %vm488, %v471, 0
        %v514 = vsel %vm488, %v472, 0
        %v517 = vsel %vm488, %v473, 0
        %v520 = vsel %vm488, %v474, 0
        %v523 = vsel %vm488, %v475, 0
        %v526 = vsel %vm488, %v476, 0
        %v529 = vsel %vm488, %v477, 0
        %v532 = vsel %vm488, %v478, 0
        %v535 = vsel %vm488, %v479, 0
        %v538 = vsel %vm488, %v480, 0
        %v541 = vsel %vm488, %v481, 0
        %v544 = vsel %vm488, %v482, 0
        %v547 = vsel %vm488, %v483, 0
        %v550 = vsel %vm488, %v484, 0
        %v553 = vsel %vm488, %v485, 0
        %v556 = vsel %vm488, %v486, 0
        %v559 = vsel %vm488, %v487, 0
        %561 = vmatpush.bf16.msra.mxu0 0
        %562 = vmatpush.bf16.msra.mxu0 0
        %563 = vmatpush.bf16.msra.mxu0 0
        %564 = vmatpush.bf16.msra.mxu0 0
        %565 = vmatpush.bf16.msra.mxu0 0
        %566 = vmatpush.bf16.msra.mxu0 0
        %567 = vmatpush.bf16.msra.mxu0 %v318
        %568 = vmatpush.bf16.msra.mxu0 %v316
        %569 = vmatmul.bf16.gmra.mxu0 %v490
        %v570 = vpop.f32.mrf.mxu0
        %v571 = vadd.f32 0.0, %v570
        %v572 = vpop.f32.mrf.mxu0
        %v573 = vadd.f32 0.0, %v572
        %574 = vmatmul.bf16.gmra.mxu0 %v493
        %v575 = vpop.f32.mrf.mxu0
        %v576 = vadd.f32 0.0, %v575
        %v577 = vpop.f32.mrf.mxu0
        %v578 = vadd.f32 0.0, %v577
        %579 = vmatmul.bf16.gmra.mxu0 %v496
        %v580 = vpop.f32.mrf.mxu0
        %v581 = vadd.f32 0.0, %v580
        %v582 = vpop.f32.mrf.mxu0
        %v583 = vadd.f32 0.0, %v582
        %584 = vmatmul.bf16.gmra.mxu0 %v499
        %v585 = vpop.f32.mrf.mxu0
        %v586 = vadd.f32 0.0, %v585
        %v587 = vpop.f32.mrf.mxu0
        %v588 = vadd.f32 0.0, %v587
        %589 = vmatmul.bf16.gmra.mxu0 %v502
        %v590 = vpop.f32.mrf.mxu0
        %v591 = vadd.f32 0.0, %v590
        %v592 = vpop.f32.mrf.mxu0
        %v593 = vadd.f32 0.0, %v592
        %594 = vmatmul.bf16.gmra.mxu0 %v505
        %v595 = vpop.f32.mrf.mxu0
        %v596 = vadd.f32 0.0, %v595
        %v597 = vpop.f32.mrf.mxu0
        %v598 = vadd.f32 0.0, %v597
        %599 = vmatmul.bf16.gmra.mxu0 %v508
        %v600 = vpop.f32.mrf.mxu0
        %v601 = vadd.f32 0.0, %v600
        %v602 = vpop.f32.mrf.mxu0
        %v603 = vadd.f32 0.0, %v602
        %604 = vmatmul.bf16.gmra.mxu0 %v511
        %v605 = vpop.f32.mrf.mxu0
        %v606 = vadd.f32 0.0, %v605
        %v607 = vpop.f32.mrf.mxu0
        %v608 = vadd.f32 0.0, %v607
        %609 = vmatmul.bf16.gmra.mxu0 %v514
        %v610 = vpop.f32.mrf.mxu0
        %v611 = vadd.f32 0.0, %v610
        %v612 = vpop.f32.mrf.mxu0
        %v613 = vadd.f32 0.0, %v612
        %614 = vmatmul.bf16.gmra.mxu0 %v517
        %v615 = vpop.f32.mrf.mxu0
        %v616 = vadd.f32 0.0, %v615
        %v617 = vpop.f32.mrf.mxu0
        %v618 = vadd.f32 0.0, %v617
        %619 = vmatmul.bf16.gmra.mxu0 %v520
        %v620 = vpop.f32.mrf.mxu0
        %v621 = vadd.f32 0.0, %v620
        %v622 = vpop.f32.mrf.mxu0
        %v623 = vadd.f32 0.0, %v622
        %624 = vmatmul.bf16.gmra.mxu0 %v523
        %v625 = vpop.f32.mrf.mxu0
        %v626 = vadd.f32 0.0, %v625
        %v627 = vpop.f32.mrf.mxu0
        %v628 = vadd.f32 0.0, %v627
        %629 = vmatmul.bf16.gmra.mxu0 %v526
        %v630 = vpop.f32.mrf.mxu0
        %v631 = vadd.f32 0.0, %v630
        %v632 = vpop.f32.mrf.mxu0
        %v633 = vadd.f32 0.0, %v632
        %634 = vmatmul.bf16.gmra.mxu0 %v529
        %v635 = vpop.f32.mrf.mxu0
        %v636 = vadd.f32 0.0, %v635
        %v637 = vpop.f32.mrf.mxu0
        %v638 = vadd.f32 0.0, %v637
        %639 = vmatmul.bf16.gmra.mxu0 %v532
        %v640 = vpop.f32.mrf.mxu0
        %v641 = vadd.f32 0.0, %v640
        %v642 = vpop.f32.mrf.mxu0
        %v643 = vadd.f32 0.0, %v642
        %644 = vmatmul.bf16.gmra.mxu0 %v535
        %v645 = vpop.f32.mrf.mxu0
        %v646 = vadd.f32 0.0, %v645
        %v647 = vpop.f32.mrf.mxu0
        %v648 = vadd.f32 0.0, %v647
        %649 = vmatmul.bf16.gmra.mxu0 %v538
        %v650 = vpop.f32.mrf.mxu0
        %v651 = vadd.f32 0.0, %v650
        %v652 = vpop.f32.mrf.mxu0
        %v653 = vadd.f32 0.0, %v652
        %654 = vmatmul.bf16.gmra.mxu0 %v541
        %v655 = vpop.f32.mrf.mxu0
        %v656 = vadd.f32 0.0, %v655
        %v657 = vpop.f32.mrf.mxu0
        %v658 = vadd.f32 0.0, %v657
        %659 = vmatmul.bf16.gmra.mxu0 %v544
        %v660 = vpop.f32.mrf.mxu0
        %v661 = vadd.f32 0.0, %v660
        %v662 = vpop.f32.mrf.mxu0
        %v663 = vadd.f32 0.0, %v662
        %664 = vmatmul.bf16.gmra.mxu0 %v547
        %v665 = vpop.f32.mrf.mxu0
        %v666 = vadd.f32 0.0, %v665
        %v667 = vpop.f32.mrf.mxu0
        %v668 = vadd.f32 0.0, %v667
        %669 = vmatmul.bf16.gmra.mxu0 %v550
        %v670 = vpop.f32.mrf.mxu0
        %v671 = vadd.f32 0.0, %v670
        %v672 = vpop.f32.mrf.mxu0
        %v673 = vadd.f32 0.0, %v672
        %674 = vmatmul.bf16.gmra.mxu0 %v553
        %v675 = vpop.f32.mrf.mxu0
        %v676 = vadd.f32 0.0, %v675
        %v677 = vpop.f32.mrf.mxu0
        %v678 = vadd.f32 0.0, %v677
        %679 = vmatmul.bf16.gmra.mxu0 %v556
        %v680 = vpop.f32.mrf.mxu0
        %v681 = vadd.f32 0.0, %v680
        %v682 = vpop.f32.mrf.mxu0
        %v683 = vadd.f32 0.0, %v682
        %684 = vmatmul.bf16.gmra.mxu0 %v559
        %v685 = vpop.f32.mrf.mxu0
        %v686 = vadd.f32 0.0, %v685
        %v687 = vpop.f32.mrf.mxu0
        %v688 = vadd.f32 0.0, %v687
        %689 = vdwg.mxu0
        %690 = vmatpush.bf16.msra.mxu0 0
        %691 = vmatpush.bf16.msra.mxu0 0
        %692 = vmatpush.bf16.msra.mxu0 0
        %693 = vmatpush.bf16.msra.mxu0 0
        %694 = vmatpush.bf16.msra.mxu0 0
        %695 = vmatpush.bf16.msra.mxu0 0
        %696 = vmatpush.bf16.msra.mxu0 %v319
        %697 = vmatpush.bf16.msra.mxu0 %v317
        %698 = vmatmul.bf16.gmra.mxu0 %v490
        %v699 = vpop.f32.mrf.mxu0
        %v700 = vadd.f32 0.0, %v699
        %v701 = vpop.f32.mrf.mxu0
        %v702 = vadd.f32 0.0, %v701
        %703 = vmatmul.bf16.gmra.mxu0 %v493
        %v704 = vpop.f32.mrf.mxu0
        %v705 = vadd.f32 0.0, %v704
        %v706 = vpop.f32.mrf.mxu0
        %v707 = vadd.f32 0.0, %v706
        %708 = vmatmul.bf16.gmra.mxu0 %v496
        %v709 = vpop.f32.mrf.mxu0
        %v710 = vadd.f32 0.0, %v709
        %v711 = vpop.f32.mrf.mxu0
        %v712 = vadd.f32 0.0, %v711
        %713 = vmatmul.bf16.gmra.mxu0 %v499
        %v714 = vpop.f32.mrf.mxu0
        %v715 = vadd.f32 0.0, %v714
        %v716 = vpop.f32.mrf.mxu0
        %v717 = vadd.f32 0.0, %v716
        %718 = vmatmul.bf16.gmra.mxu0 %v502
        %v719 = vpop.f32.mrf.mxu0
        %v720 = vadd.f32 0.0, %v719
        %v721 = vpop.f32.mrf.mxu0
        %v722 = vadd.f32 0.0, %v721
        %723 = vmatmul.bf16.gmra.mxu0 %v505
        %v724 = vpop.f32.mrf.mxu0
        %v725 = vadd.f32 0.0, %v724
        %v726 = vpop.f32.mrf.mxu0
        %v727 = vadd.f32 0.0, %v726
        %728 = vmatmul.bf16.gmra.mxu0 %v508
        %v729 = vpop.f32.mrf.mxu0
        %v730 = vadd.f32 0.0, %v729
        %v731 = vpop.f32.mrf.mxu0
        %v732 = vadd.f32 0.0, %v731
        %733 = vmatmul.bf16.gmra.mxu0 %v511
        %v734 = vpop.f32.mrf.mxu0
        %v735 = vadd.f32 0.0, %v734
        %v736 = vpop.f32.mrf.mxu0
        %v737 = vadd.f32 0.0, %v736
        %738 = vmatmul.bf16.gmra.mxu0 %v514
        %v739 = vpop.f32.mrf.mxu0
        %v740 = vadd.f32 0.0, %v739
        %v741 = vpop.f32.mrf.mxu0
        %v742 = vadd.f32 0.0, %v741
        %743 = vmatmul.bf16.gmra.mxu0 %v517
        %v744 = vpop.f32.mrf.mxu0
        %v745 = vadd.f32 0.0, %v744
        %v746 = vpop.f32.mrf.mxu0
        %v747 = vadd.f32 0.0, %v746
        %748 = vmatmul.bf16.gmra.mxu0 %v520
        %v749 = vpop.f32.mrf.mxu0
        %v750 = vadd.f32 0.0, %v749
        %v751 = vpop.f32.mrf.mxu0
        %v752 = vadd.f32 0.0, %v751
        %753 = vmatmul.bf16.gmra.mxu0 %v523
        %v754 = vpop.f32.mrf.mxu0
        %v755 = vadd.f32 0.0, %v754
        %v756 = vpop.f32.mrf.mxu0
        %v757 = vadd.f32 0.0, %v756
        %758 = vmatmul.bf16.gmra.mxu0 %v526
        %v759 = vpop.f32.mrf.mxu0
        %v760 = vadd.f32 0.0, %v759
        %v761 = vpop.f32.mrf.mxu0
        %v762 = vadd.f32 0.0, %v761
        %763 = vmatmul.bf16.gmra.mxu0 %v529
        %v764 = vpop.f32.mrf.mxu0
        %v765 = vadd.f32 0.0, %v764
        %v766 = vpop.f32.mrf.mxu0
        %v767 = vadd.f32 0.0, %v766
        %768 = vmatmul.bf16.gmra.mxu0 %v532
        %v769 = vpop.f32.mrf.mxu0
        %v770 = vadd.f32 0.0, %v769
        %v771 = vpop.f32.mrf.mxu0
        %v772 = vadd.f32 0.0, %v771
        %773 = vmatmul.bf16.gmra.mxu0 %v535
        %v774 = vpop.f32.mrf.mxu0
        %v775 = vadd.f32 0.0, %v774
        %v776 = vpop.f32.mrf.mxu0
        %v777 = vadd.f32 0.0, %v776
        %778 = vmatmul.bf16.gmra.mxu0 %v538
        %v779 = vpop.f32.mrf.mxu0
        %v780 = vadd.f32 0.0, %v779
        %v781 = vpop.f32.mrf.mxu0
        %v782 = vadd.f32 0.0, %v781
        %783 = vmatmul.bf16.gmra.mxu0 %v541
        %v784 = vpop.f32.mrf.mxu0
        %v785 = vadd.f32 0.0, %v784
        %v786 = vpop.f32.mrf.mxu0
        %v787 = vadd.f32 0.0, %v786
        %788 = vmatmul.bf16.gmra.mxu0 %v544
        %v789 = vpop.f32.mrf.mxu0
        %v790 = vadd.f32 0.0, %v789
        %v791 = vpop.f32.mrf.mxu0
        %v792 = vadd.f32 0.0, %v791
        %793 = vmatmul.bf16.gmra.mxu0 %v547
        %v794 = vpop.f32.mrf.mxu0
        %v795 = vadd.f32 0.0, %v794
        %v796 = vpop.f32.mrf.mxu0
        %v797 = vadd.f32 0.0, %v796
        %798 = vmatmul.bf16.gmra.mxu0 %v550
        %v799 = vpop.f32.mrf.mxu0
        %v800 = vadd.f32 0.0, %v799
        %v801 = vpop.f32.mrf.mxu0
        %v802 = vadd.f32 0.0, %v801
        %803 = vmatmul.bf16.gmra.mxu0 %v553
        %v804 = vpop.f32.mrf.mxu0
        %v805 = vadd.f32 0.0, %v804
        %v806 = vpop.f32.mrf.mxu0
        %v807 = vadd.f32 0.0, %v806
        %808 = vmatmul.bf16.gmra.mxu0 %v556
        %v809 = vpop.f32.mrf.mxu0
        %v810 = vadd.f32 0.0, %v809
        %v811 = vpop.f32.mrf.mxu0
        %v812 = vadd.f32 0.0, %v811
        %813 = vmatmul.bf16.gmra.mxu0 %v559
        %v814 = vpop.f32.mrf.mxu0
        %v815 = vadd.f32 0.0, %v814
        %v816 = vpop.f32.mrf.mxu0
        %v817 = vadd.f32 0.0, %v816
        %818 = vdwg.mxu0
        %v819 = vpack.c.bf16 %v700, %v571
        %v820 = vpack.c.bf16 %v702, %v573
        %v821 = vpack.c.bf16 %v705, %v576
        %v822 = vpack.c.bf16 %v707, %v578
        %v823 = vpack.c.bf16 %v710, %v581
        %v824 = vpack.c.bf16 %v712, %v583
        %v825 = vpack.c.bf16 %v715, %v586
        %v826 = vpack.c.bf16 %v717, %v588
        %v827 = vpack.c.bf16 %v720, %v591
        %v828 = vpack.c.bf16 %v722, %v593
        %v829 = vpack.c.bf16 %v725, %v596
        %v830 = vpack.c.bf16 %v727, %v598
        %v831 = vpack.c.bf16 %v730, %v601
        %v832 = vpack.c.bf16 %v732, %v603
        %v833 = vpack.c.bf16 %v735, %v606
        %v834 = vpack.c.bf16 %v737, %v608
        %835 = vst [vmem:[%s223] sm:$0xff] %v819
        %836 = vst [vmem:[%s223 + $0x8] sm:$0xff] %v820
        %837 = vst [vmem:[%s223 + $0x10] sm:$0xff] %v821
        %838 = vst [vmem:[%s223 + $0x18] sm:$0xff] %v822
        %839 = vst [vmem:[%s223 + $0x20] sm:$0xff] %v823
        %840 = vst [vmem:[%s223 + $0x28] sm:$0xff] %v824
        %841 = vst [vmem:[%s223 + $0x30] sm:$0xff] %v825
        %842 = vst [vmem:[%s223 + $0x38] sm:$0xff] %v826
        %843 = vst [vmem:[%s223 + $0x40] sm:$0xff] %v827
        %844 = vst [vmem:[%s223 + $0x48] sm:$0xff] %v828
        %845 = vst [vmem:[%s223 + $0x50] sm:$0xff] %v829
        %846 = vst [vmem:[%s223 + $0x58] sm:$0xff] %v830
        %847 = vst [vmem:[%s223 + $0x60] sm:$0xff] %v831
        %848 = vst [vmem:[%s223 + $0x68] sm:$0xff] %v832
        %849 = vst [vmem:[%s223 + $0x70] sm:$0xff] %v833
        %850 = vst [vmem:[%s223 + $0x78] sm:$0xff] %v834
        %v851 = vpack.c.bf16 %v780, %v651
        %v852 = vpack.c.bf16 %v782, %v653
        %v853 = vpack.c.bf16 %v785, %v656
        %v854 = vpack.c.bf16 %v787, %v658
        %v855 = vpack.c.bf16 %v790, %v661
        %v856 = vpack.c.bf16 %v792, %v663
        %v857 = vpack.c.bf16 %v795, %v666
        %v858 = vpack.c.bf16 %v797, %v668
        %v859 = vpack.c.bf16 %v800, %v671
        %v860 = vpack.c.bf16 %v802, %v673
        %v861 = vpack.c.bf16 %v805, %v676
        %v862 = vpack.c.bf16 %v807, %v678
        %v863 = vpack.c.bf16 %v810, %v681
        %v864 = vpack.c.bf16 %v812, %v683
        %v865 = vpack.c.bf16 %v815, %v686
        %v866 = vpack.c.bf16 %v817, %v688
        %867 = vst [vmem:[%s237] sm:$0xff] %v851
        %868 = vst [vmem:[%s237 + $0x8] sm:$0xff] %v852
        %869 = vst [vmem:[%s237 + $0x10] sm:$0xff] %v853
        %870 = vst [vmem:[%s237 + $0x18] sm:$0xff] %v854
        %871 = vst [vmem:[%s237 + $0x20] sm:$0xff] %v855
        %872 = vst [vmem:[%s237 + $0x28] sm:$0xff] %v856
        %873 = vst [vmem:[%s237 + $0x30] sm:$0xff] %v857
        %874 = vst [vmem:[%s237 + $0x38] sm:$0xff] %v858
        %875 = vst [vmem:[%s237 + $0x40] sm:$0xff] %v859
        %876 = vst [vmem:[%s237 + $0x48] sm:$0xff] %v860
        %877 = vst [vmem:[%s237 + $0x50] sm:$0xff] %v861
        %878 = vst [vmem:[%s237 + $0x58] sm:$0xff] %v862
        %879 = vst [vmem:[%s237 + $0x60] sm:$0xff] %v863
        %880 = vst [vmem:[%s237 + $0x68] sm:$0xff] %v864
        %881 = vst [vmem:[%s237 + $0x70] sm:$0xff] %v865
        %882 = vst [vmem:[%s237 + $0x78] sm:$0xff] %v866
        %883 = vxpose.xlu0.b32.start [1/16] %v611, 128
        %884 = vxpose.xlu0.b32.cont [2/16] %v613, 128
        %885 = vxpose.xlu0.b32.cont [3/16] %v616, 128
        %886 = vxpose.xlu0.b32.cont [4/16] %v618, 128
        %887 = vxpose.xlu0.b32.cont [5/16] %v621, 128
        %888 = vxpose.xlu0.b32.cont [6/16] %v623, 128
        %889 = vxpose.xlu0.b32.cont [7/16] %v626, 128
        %890 = vxpose.xlu0.b32.cont [8/16] %v628, 128
        %891 = vxpose.xlu0.b32.cont [9/16] %v631, 128
        %892 = vxpose.xlu0.b32.cont [10/16] %v633, 128
        %893 = vxpose.xlu0.b32.cont [11/16] %v636, 128
        %894 = vxpose.xlu0.b32.cont [12/16] %v638, 128
        %895 = vxpose.xlu0.b32.cont [13/16] %v641, 128
        %896 = vxpose.xlu0.b32.cont [14/16] %v643, 128
        %897 = vxpose.xlu0.b32.cont [15/16] %v646, 128
        %898 = vxpose.xlu0.b32.end [16/16] %v648, 128
        %v899 = vpop.trf.xlu0
        %v900 = vpop.trf.xlu0
        %v901 = vpop.trf.xlu0
        %v902 = vpop.trf.xlu0
        %v903 = vpop.trf.xlu0
        %v904 = vpop.trf.xlu0
        %v905 = vpop.trf.xlu0
        %v906 = vpop.trf.xlu0
        %v907 = vpop.trf.xlu0
        %v908 = vpop.trf.xlu0
        %v909 = vpop.trf.xlu0
        %v910 = vpop.trf.xlu0
        %v911 = vpop.trf.xlu0
        %v912 = vpop.trf.xlu0
        %v913 = vpop.trf.xlu0
        %v914 = vpop.trf.xlu0
        %915 = vxpose.xlu0.b32.start [1/16] %v740, 128
        %916 = vxpose.xlu0.b32.cont [2/16] %v742, 128
        %917 = vxpose.xlu0.b32.cont [3/16] %v745, 128
        %918 = vxpose.xlu0.b32.cont [4/16] %v747, 128
        %919 = vxpose.xlu0.b32.cont [5/16] %v750, 128
        %920 = vxpose.xlu0.b32.cont [6/16] %v752, 128
        %921 = vxpose.xlu0.b32.cont [7/16] %v755, 128
        %922 = vxpose.xlu0.b32.cont [8/16] %v757, 128
        %923 = vxpose.xlu0.b32.cont [9/16] %v760, 128
        %924 = vxpose.xlu0.b32.cont [10/16] %v762, 128
        %925 = vxpose.xlu0.b32.cont [11/16] %v765, 128
        %926 = vxpose.xlu0.b32.cont [12/16] %v767, 128
        %927 = vxpose.xlu0.b32.cont [13/16] %v770, 128
        %928 = vxpose.xlu0.b32.cont [14/16] %v772, 128
        %929 = vxpose.xlu0.b32.cont [15/16] %v775, 128
        %930 = vxpose.xlu0.b32.end [16/16] %v777, 128
        %v931 = vpop.trf.xlu0
        %v932 = vpop.trf.xlu0
        %v933 = vpop.trf.xlu0
        %v934 = vpop.trf.xlu0
        %v935 = vpop.trf.xlu0
        %v936 = vpop.trf.xlu0
        %v937 = vpop.trf.xlu0
        %v938 = vpop.trf.xlu0
        %v939 = vpop.trf.xlu0
        %v940 = vpop.trf.xlu0
        %v941 = vpop.trf.xlu0
        %v942 = vpop.trf.xlu0
        %v943 = vpop.trf.xlu0
        %v944 = vpop.trf.xlu0
        %v945 = vpop.trf.xlu0
        %v946 = vpop.trf.xlu0
        %v947 = vpack.c.bf16 %v899, %v899
        %v948 = vpack.c.bf16 %v900, %v900
        %v949 = vpack.c.bf16 %v901, %v901
        %v950 = vpack.c.bf16 %v902, %v902
        %v951 = vpack.c.bf16 %v903, %v903
        %v952 = vpack.c.bf16 %v904, %v904
        %v953 = vpack.c.bf16 %v905, %v905
        %v954 = vpack.c.bf16 %v906, %v906
        %v955 = vpack.c.bf16 %v907, %v907
        %v956 = vpack.c.bf16 %v908, %v908
        %v957 = vpack.c.bf16 %v909, %v909
        %v958 = vpack.c.bf16 %v910, %v910
        %v959 = vpack.c.bf16 %v911, %v911
        %v960 = vpack.c.bf16 %v912, %v912
        %v961 = vpack.c.bf16 %v913, %v913
        %v962 = vpack.c.bf16 %v914, %v914
        %v963 = vpack.c.bf16 %v931, %v931
        %v964 = vpack.c.bf16 %v932, %v932
        %v965 = vpack.c.bf16 %v933, %v933
        %v966 = vpack.c.bf16 %v934, %v934
        %v967 = vpack.c.bf16 %v935, %v935
        %v968 = vpack.c.bf16 %v936, %v936
        %v969 = vpack.c.bf16 %v937, %v937
        %v970 = vpack.c.bf16 %v938, %v938
        %v971 = vpack.c.bf16 %v939, %v939
        %v972 = vpack.c.bf16 %v940, %v940
        %v973 = vpack.c.bf16 %v941, %v941
        %v974 = vpack.c.bf16 %v942, %v942
        %v975 = vpack.c.bf16 %v943, %v943
        %v976 = vpack.c.bf16 %v944, %v944
        %v977 = vpack.c.bf16 %v945, %v945
        %v978 = vpack.c.bf16 %v946, %v946
        %979 = vst [vmem:[%s230] sm:$0xf] %v947
        %980 = vst [vmem:[%s230 + $0x4] sm:$0xf] %v948
        %981 = vst [vmem:[%s230 + $0x8] sm:$0xf] %v949
        %982 = vst [vmem:[%s230 + $0xc] sm:$0xf] %v950
        %983 = vst [vmem:[%s230 + $0x10] sm:$0xf] %v951
        %984 = vst [vmem:[%s230 + $0x14] sm:$0xf] %v952
        %985 = vst [vmem:[%s230 + $0x18] sm:$0xf] %v953
        %986 = vst [vmem:[%s230 + $0x1c] sm:$0xf] %v954
        %987 = vst [vmem:[%s230 + $0x20] sm:$0xf] %v955
        %988 = vst [vmem:[%s230 + $0x24] sm:$0xf] %v956
        %989 = vst [vmem:[%s230 + $0x28] sm:$0xf] %v957
        %990 = vst [vmem:[%s230 + $0x2c] sm:$0xf] %v958
        %991 = vst [vmem:[%s230 + $0x30] sm:$0xf] %v959
        %992 = vst [vmem:[%s230 + $0x34] sm:$0xf] %v960
        %993 = vst [vmem:[%s230 + $0x38] sm:$0xf] %v961
        %994 = vst [vmem:[%s230 + $0x3c] sm:$0xf] %v962
        %995 = vst [vmem:[%s230 + $0x40] sm:$0xf] %v963
        %996 = vst [vmem:[%s230 + $0x44] sm:$0xf] %v964
        %997 = vst [vmem:[%s230 + $0x48] sm:$0xf] %v965
        %998 = vst [vmem:[%s230 + $0x4c] sm:$0xf] %v966
        %999 = vst [vmem:[%s230 + $0x50] sm:$0xf] %v967
        %1000 = vst [vmem:[%s230 + $0x54] sm:$0xf] %v968
        %1001 = vst [vmem:[%s230 + $0x58] sm:$0xf] %v969
        %1002 = vst [vmem:[%s230 + $0x5c] sm:$0xf] %v970
        %1003 = vst [vmem:[%s230 + $0x60] sm:$0xf] %v971
        %1004 = vst [vmem:[%s230 + $0x64] sm:$0xf] %v972
        %1005 = vst [vmem:[%s230 + $0x68] sm:$0xf] %v973
        %1006 = vst [vmem:[%s230 + $0x6c] sm:$0xf] %v974
        %1007 = vst [vmem:[%s230 + $0x70] sm:$0xf] %v975
        %1008 = vst [vmem:[%s230 + $0x74] sm:$0xf] %v976
        %1009 = vst [vmem:[%s230 + $0x78] sm:$0xf] %v977
        %1010 = vst [vmem:[%s230 + $0x7c] sm:$0xf] %v978
        %s1011 = sand.u32 %s93, 1
        %s1012 = scalar_lea.sflag [#allocation3], %s1011
        %s1013 = sand.u32 %s93, 1
        %s1014 = smul.addr %s1013, 128
        %s1015 = scalar_lea.vmem [#allocation2], %s1014
        %s1016 = sand.u32 %s22, 1
        %s1017 = scalar_lea.sflag [#allocation5], %s1016
        %s1018 = sand.u32 %s121, 1
        %s1019 = smul.addr %s1018, 128
        %s1020 = scalar_lea.vmem [#allocation4], %s1019
        %s1021 = sand.u32 %s22, 1
        %s1022 = scalar_lea.sflag [#allocation5], %s1021
        %s1023 = sand.u32 %s149, 1
        %s1024 = smul.addr %s1023, 128
        %s1025 = scalar_lea.vmem [#allocation6], %s1024
        // Predicated region
        $region29: #{tpu_custom_call.1} parent=27 // pred_check
          %p1026 = pneg %p103
        $region30: #{tpu_custom_call.1} parent=27 // pred_check_branch
          %1028 = sbr.rel (%p1026) target = $region32
        $region31: #{tpu_custom_call.1} parent=27 // pred_region
          %s1029 = smul.u32 2, %s27
          %1031 = vsyncadd %s1012, 0
          %s1032 = smul.addr %s26, 32
          %s1033 = sadd.s32 %s1029, %s1032
          %s1034 = smul.addr %s1033, 4
          %s1035 = scalar_lea.hbm %s2, %s1034
          %s1036 = sshll.u32 %s1015, 4
          %s1037 = int_to_ptr.vmem [resolvable:$true] %s1036
          %s1038 = sshll.u32 %s1035, 4
          %s1039 = int_to_ptr.hbm [resolvable:$true] %s1038
          %1044 = dma.vmem_to_hbm [thread:$0]  %s1037, 2048, %s1039, %s1012, 128, 128, 8
        $region32: #{tpu_custom_call.1} parent=27 // pred_fallthru
          _
        // Predicated region
        $region33: #{tpu_custom_call.1} parent=27 // pred_check
          %p1045 = pneg %p131
        $region34: #{tpu_custom_call.1} parent=27 // pred_check_branch
          %1047 = sbr.rel (%p1045) target = $region36
        $region35: #{tpu_custom_call.1} parent=27 // pred_region
          %s1048 = smul.u32 32, %s27
          %1050 = vsyncadd %s1017, 0
          %s1051 = smul.addr %s26, 32
          %s1052 = sadd.s32 %s1048, %s1051
          %s1053 = smul.addr %s1052, 4
          %s1054 = scalar_lea.hbm %s3, %s1053
          %s1055 = sshll.u32 %s1020, 4
          %s1056 = int_to_ptr.vmem [resolvable:$true] %s1055
          %s1057 = sshll.u32 %s1054, 4
          %s1058 = int_to_ptr.hbm [resolvable:$true] %s1057
          %1063 = dma.vmem_to_hbm [thread:$0]  %s1056, 2048, %s1058, %s1017, 64, 64, 4
        $region36: #{tpu_custom_call.1} parent=27 // pred_fallthru
          _
        // Predicated region
        $region37: #{tpu_custom_call.1} parent=27 // pred_check
          %p1064 = pneg %p159
        $region38: #{tpu_custom_call.1} parent=27 // pred_check_branch
          %1066 = sbr.rel (%p1064) target = $region40
        $region39: #{tpu_custom_call.1} parent=27 // pred_region
          %s1067 = smul.u32 2, %s27
          %1069 = vsyncadd %s1022, 0
          %s1070 = smul.addr %s26, 32
          %s1071 = sadd.s32 %s1067, %s1070
          %s1072 = smul.addr %s1071, 4
          %s1073 = scalar_lea.hbm %s4, %s1072
          %s1074 = sshll.u32 %s1025, 4
          %s1075 = int_to_ptr.vmem [resolvable:$true] %s1074
          %s1076 = sshll.u32 %s1073, 4
          %s1077 = int_to_ptr.hbm [resolvable:$true] %s1076
          %1082 = dma.vmem_to_hbm [thread:$0]  %s1075, 2048, %s1077, %s1022, 128, 128, 8
        $region40: #{tpu_custom_call.1} parent=27 // pred_fallthru
          _
      $region28: #{tpu_custom_call.1} parent=5 // pred_fallthru
        _
      %p1083 = scmp.le.s32.totalorder 2, %s17
      // Predicated region
      $region41: #{tpu_custom_call.1} parent=5 // pred_check
        %p1084 = pneg %p1083
      $region42: #{tpu_custom_call.1} parent=5 // pred_check_branch
        %1086 = sbr.rel (%p1084) target = $region44
      $region43: #{tpu_custom_call.1} parent=5 // pred_region
        %s1087 = ssub.s32 %s17, 2
        // Predicated region
        $region45: #{tpu_custom_call.1} parent=43 // pred_check
          %p1088 = pneg %p109
        $region46: #{tpu_custom_call.1} parent=43 // pred_check_branch
          %1090 = sbr.rel (%p1088) target = $region48
        $region47: #{tpu_custom_call.1} parent=43 // pred_region
          %s1091 = sand.u32 %s94, 1
          %s1092 = scalar_lea.sflag [#allocation3], %s1091
          %s1093 = sand.u32 %s94, 1
          %s1094 = smul.addr %s1093, 128
          %s1095 = scalar_lea.vmem [#allocation2], %s1094
          %1097 = dma.done %s1092, 2048
        $region48: #{tpu_custom_call.1} parent=43 // pred_fallthru
          _
        // Predicated region
        $region49: #{tpu_custom_call.1} parent=43 // pred_check
          %p1098 = pneg %p137
        $region50: #{tpu_custom_call.1} parent=43 // pred_check_branch
          %1100 = sbr.rel (%p1098) target = $region52
        $region51: #{tpu_custom_call.1} parent=43 // pred_region
          %s1101 = sand.u32 %s23, 1
          %s1102 = scalar_lea.sflag [#allocation5], %s1101
          %s1103 = sand.u32 %s122, 1
          %s1104 = smul.addr %s1103, 128
          %s1105 = scalar_lea.vmem [#allocation4], %s1104
          %1107 = dma.done %s1102, 2048
        $region52: #{tpu_custom_call.1} parent=43 // pred_fallthru
          _
        // Predicated region
        $region53: #{tpu_custom_call.1} parent=43 // pred_check
          %p1108 = pneg %p165
        $region54: #{tpu_custom_call.1} parent=43 // pred_check_branch
          %1110 = sbr.rel (%p1108) target = $region56
        $region55: #{tpu_custom_call.1} parent=43 // pred_region
          %s1111 = sand.u32 %s23, 1
          %s1112 = scalar_lea.sflag [#allocation5], %s1111
          %s1113 = sand.u32 %s150, 1
          %s1114 = smul.addr %s1113, 128
          %s1115 = scalar_lea.vmem [#allocation6], %s1114
          %1117 = dma.done %s1112, 2048
        $region56: #{tpu_custom_call.1} parent=43 // pred_fallthru
          _
      $region44: #{tpu_custom_call.1} parent=5 // pred_fallthru
        _
    $region6: #{tpu_custom_call.1} parent=1 // loop_footer
      %s21 = sadd.s32 1, %s17
    $region7: #{tpu_custom_call.1} parent=1 // loop_footer_branch
      %16 = sbr.rel target = $region3
    $region8: #{tpu_custom_call.1} parent=1 // loop_exit
      _
    %1118 = vsyncpa [#allocation3], 1
    %s1119 = scalar_lea.sflag [#allocation3], 1
    %1120 = vsyncpa %s1119, 1
    %1121 = vsyncpa [#allocation5], 1
    %s1122 = scalar_lea.sflag [#allocation5], 1
    %1123 = vsyncpa %s1122, 1

</llo_original>
